<compile_context>
chip_gen: v6e
topology: v6e:2x2x1
jax: 0.10.0
libtpu: 0.0.40
codegen_flags: <defaults>
</compile_context>

<pallas_src>
import functools

import jax
import jax.numpy as jnp
from jax.experimental import pallas as pl
from jax.experimental.pallas import tpu as pltpu

# ----------------------------- hyper-parameters ------------------------------
DIM = 128          # feature dimension (MoCo default 128; 128-aligned for the MXU)
K_QUEUE = 1024     # queue size (MoCo default 65536, kept small; K % batch == 0)
M_MOM = 0.999      # momentum for key-encoder update
T_TEMP = 0.07      # softmax temperature
LOGITS_K_TILE = 256  # queue tile per grid step (sweep toward 2048-8192 at real K)
_VMEM_LIMIT = 48 * 1024 * 1024  # safe on v5e/v6e/v7x, above the scoped default

_VMEM = pl.BlockSpec(memory_space=pltpu.MemorySpace.VMEM)


# ------------------------------ Pallas kernels -------------------------------
def _encoder_kernel(x_ref, w_ref, b_ref, out_ref):
    # x_ref: (N, C*HW) f32, w_ref: (C*HW, D) f32 (GAP folded in), b_ref: (1, D) f32
    feat = jnp.dot(x_ref[...], w_ref[...],
                   preferred_element_type=jnp.float32) + b_ref[...]   # (N, D)
    sumsq = jnp.sum(feat * feat, axis=-1, keepdims=True)
    # F.normalize(dim=1, eps=1e-12): x / max(||x||, eps) == x * rsqrt(max(||x||^2, eps^2))
    out_ref[...] = feat * jax.lax.rsqrt(jnp.maximum(sumsq, 1e-24))


def _momentum_kernel(pk_ref, pq_ref, out_ref, *, m):
    # param_k = m * param_k + (1 - m) * param_q   (all params fused in one buffer)
    out_ref[...] = pk_ref[...] * m + pq_ref[...] * (1.0 - m)


def _lneg_kernel(q_ref, queue_ref, out_ref, *, inv_t):
    # q_ref: (N, D) f32; queue_ref: (TK, D) bf16 rows; out_ref: (N, TK) f32
    qb = q_ref[...].astype(queue_ref.dtype)
    out_ref[...] = jax.lax.dot_general(
        qb, queue_ref[...],
        dimension_numbers=(((1,), (1,)), ((), ())),   # contract over D
        preferred_element_type=jnp.float32) * inv_t


# ------------------------------ kernel wrappers -------------------------------
def encode_pair(im_q, im_k, params_q, params_k):
    """Run query+key encoders in one pipelined pallas_call. Returns (q, k), each (N, D)."""
    n, c, h, w = im_q.shape
    hw = h * w
    chw = c * hw
    d = params_q["w"].shape[1]

    def eff_w(p):
        # fold the global average pool into the fc weight (exact, linear):
        # feat[n,d] = sum_{c,i} x[n,c,i] * (W[c,d] / HW) + b[d]
        return jnp.repeat(p["w"], hw, axis=0) * (1.0 / hw)            # (C*HW, D)

    x_s = jnp.stack([im_q.reshape(n, chw), im_k.reshape(n, chw)])      # (2, N, CHW)
    w_s = jnp.stack([eff_w(params_q), eff_w(params_k)])                # (2, CHW, D)
    b_s = jnp.stack([params_q["b"], params_k["b"]])                    # (2, 1, D)

    feats = pl.pallas_call(
        _encoder_kernel,
        out_shape=jax.ShapeDtypeStruct((2, n, d), jnp.float32),
        grid=(2,),
        in_specs=[
            pl.BlockSpec((pl.Squeezed(), n, chw), lambda e: (e, 0, 0)),
            pl.BlockSpec((pl.Squeezed(), chw, d), lambda e: (e, 0, 0)),
            pl.BlockSpec((pl.Squeezed(), 1, d), lambda e: (e, 0, 0)),
        ],
        out_specs=pl.BlockSpec((pl.Squeezed(), n, d), lambda e: (e, 0, 0)),
        compiler_params=pltpu.CompilerParams(
            dimension_semantics=("parallel",),
            vmem_limit_bytes=_VMEM_LIMIT),
    )(x_s, w_s, b_s)
    return feats[0], feats[1]


def _flatten_params(params):
    order = ("w", "b")
    leaves = [params[name].reshape(-1) for name in order]
    sizes = [int(l.shape[0]) for l in leaves]
    shapes = [params[name].shape for name in order]
    flat = jnp.concatenate(leaves)
    pad = (-flat.shape[0]) % 128
    if pad:
        flat = jnp.pad(flat, (0, pad))
    return flat.reshape(-1, 128), sizes, shapes


def _unflatten_params(flat2d, sizes, shapes):
    flat = flat2d.reshape(-1)
    out, off = {}, 0
    for name, sz, shp in zip(("w", "b"), sizes, shapes):
        out[name] = flat[off:off + sz].reshape(shp)
        off += sz
    return out


def momentum_update_all(params_k, params_q, m=M_MOM):
    """One fused, aliased pallas_call over ALL key-encoder params (in-place update)."""
    flat_k, sizes, shapes = _flatten_params(params_k)
    flat_q, _, _ = _flatten_params(params_q)
    new_flat = pl.pallas_call(
        functools.partial(_momentum_kernel, m=m),
        out_shape=jax.ShapeDtypeStruct(flat_k.shape, flat_k.dtype),
        in_specs=[_VMEM, _VMEM],
        out_specs=_VMEM,
        input_output_aliases={0: 0},  # update param_k in place (no extra HBM stream)
        compiler_params=pltpu.CompilerParams(vmem_limit_bytes=_VMEM_LIMIT),
    )(flat_k, flat_q)
    return _unflatten_params(new_flat, sizes, shapes)


def negative_logits(q, queue_kd, t=T_TEMP):
    """l_neg / T with the queue streamed in K-tiles. q: (N, D) f32, queue_kd: (K, D) bf16."""
    n, d = q.shape
    kq = queue_kd.shape[0]
    tk = LOGITS_K_TILE if (kq % LOGITS_K_TILE == 0) else kq   # 128-aligned, divides K
    return pl.pallas_call(
        functools.partial(_lneg_kernel, inv_t=1.0 / t),
        out_shape=jax.ShapeDtypeStruct((n, kq), jnp.float32),
        grid=(kq // tk,),
        in_specs=[
            pl.BlockSpec((n, d), lambda j: (0, 0)),      # q resident across K tiles
            pl.BlockSpec((tk, d), lambda j: (j, 0)),     # stream queue rows
        ],
        out_specs=pl.BlockSpec((n, tk), lambda j: (0, j)),  # lane-dense output tiles
        compiler_params=pltpu.CompilerParams(
            dimension_semantics=("parallel",),
            vmem_limit_bytes=_VMEM_LIMIT),
    )(q, queue_kd)


# ------------------------------- MoCo forward --------------------------------
def moco_forward(params_q, params_k, queue_kd, queue_ptr, im_q, im_k, shuffle_key):
    """Returns (logits, labels, new_params_k, new_queue, new_queue_ptr).

    queue_kd is stored (K, D) in bf16 (transposed + down-cast internal layout of the
    reference (dim, K) f32 buffer): lane-dense matmul operand + contiguous enqueue.
    """
    n = im_q.shape[0]

    # momentum update of the key encoder (no-grad path in PyTorch)
    new_params_k = momentum_update_all(params_k, params_q)

    # _batch_shuffle_ddp / _batch_unshuffle_ddp: net identity on a single device and
    # the synthetic encoder is batch-permutation-equivariant -> skip the image gather.
    del shuffle_key  # TODO(synk): reinstate DDP batch shuffle (needed only for multi-host BN).

    # query + key features in one pipelined encoder call
    q, k = encode_pair(im_q, im_k, params_q, new_params_k)
    k = jax.lax.stop_gradient(k)

    # logits = [l_pos, l_neg] / T ; labels = zeros
    inv_t = 1.0 / T_TEMP
    l_pos = jnp.sum(q * k, axis=-1, keepdims=True) * inv_t   # tiny (N,1); XLA fuses it
    l_neg = negative_logits(q, queue_kd)                     # Pallas, K-tiled, bf16 queue
    logits = jnp.concatenate([l_pos, l_neg], axis=-1)
    labels = jnp.zeros((n,), dtype=jnp.int32)                # torch.long -> int32

    # _dequeue_and_enqueue: queue rows [ptr:ptr+n] = k ; ptr = (ptr + n) % K
    ptr = queue_ptr[0]
    new_queue = jax.lax.dynamic_update_slice(
        queue_kd, k.astype(queue_kd.dtype), (ptr, 0))        # contiguous row write
    new_queue_ptr = jnp.array([(ptr + n) % K_QUEUE], dtype=jnp.int32)

    return logits, labels, new_params_k, new_queue, new_queue_ptr


# ----------------------------------- main -------------------------------------
if __name__ == "__main__":
    key = jax.random.PRNGKey(0)
    k_w, k_b, k_queue, k_imq, k_imk, k_shuf = jax.random.split(key, 6)

    N, C, H, W = 8, 4, 16, 16  # batch must divide K_QUEUE

    # deterministic encoder params; encoder_k initialized as a copy of encoder_q
    w_q = jax.random.normal(k_w, (C, DIM), jnp.float32) * 0.05
    b_q = jax.random.normal(k_b, (1, DIM), jnp.float32) * 0.01
    params_q = {"w": w_q, "b": b_q}
    params_k = {"w": w_q, "b": b_q}  # param_k.data.copy_(param_q.data)

    # reference buffer: randn(dim, K) normalized along dim=0;
    # stored internally as (K, D) bf16 (row layout + half HBM traffic).
    queue_dk = jax.random.normal(k_queue, (DIM, K_QUEUE), jnp.float32)
    queue_dk = queue_dk / jnp.maximum(
        jnp.sqrt(jnp.sum(queue_dk * queue_dk, axis=0, keepdims=True)), 1e-12)
    queue = queue_dk.T.astype(jnp.bfloat16)                  # (K, D) bf16
    queue_ptr = jnp.zeros((1,), dtype=jnp.int32)

    im_q = jax.random.normal(k_imq, (N, C, H, W), jnp.float32)
    im_k = jax.random.normal(k_imk, (N, C, H, W), jnp.float32)

    fwd = jax.jit(moco_forward)
    logits, labels, params_k, queue, queue_ptr = fwd(
        params_q, params_k, queue, queue_ptr, im_q, im_k, k_shuf)
    jax.block_until_ready((logits, labels, params_k, queue, queue_ptr))

    assert logits.shape == (N, 1 + K_QUEUE)
    assert labels.shape == (N,)
    assert queue.shape == (K_QUEUE, DIM)
    assert params_k["w"].shape == (C, DIM) and params_k["b"].shape == (1, DIM)
    assert int(queue_ptr[0]) == N % K_QUEUE
    print("KERNEL_OK")
</pallas_src>

<mosaic_0001>
module attributes {stable_mosaic.version = 11 : i64} {
  func.func @_momentum_kernel(%arg0: memref<5x128xf32, #tpu.memory_space<vmem>>, %arg1: memref<5x128xf32, #tpu.memory_space<vmem>>, %arg2: memref<5x128xf32, #tpu.memory_space<vmem>>) attributes {dimension_semantics = [], scalar_prefetch = 0 : i64, scratch_operands = 0 : i64, tpu.core_type = #tpu.core_type<tc>} {
    %c0 = arith.constant 0 : index
    %c0_0 = arith.constant 0 : index
    %0 = vector.load %arg0[%c0, %c0_0] : memref<5x128xf32, #tpu.memory_space<vmem>>, vector<5x128xf32>
    %cst = arith.constant 9.990000e-01 : f32
    %1 = vector.broadcast %cst : f32 to vector<5x128xf32>
    %2 = arith.mulf %0, %1 : vector<5x128xf32>
    %c0_1 = arith.constant 0 : index
    %c0_2 = arith.constant 0 : index
    %3 = vector.load %arg1[%c0_1, %c0_2] : memref<5x128xf32, #tpu.memory_space<vmem>>, vector<5x128xf32>
    %cst_3 = arith.constant 1.000000e-03 : f32
    %4 = vector.broadcast %cst_3 : f32 to vector<5x128xf32>
    %5 = arith.mulf %3, %4 : vector<5x128xf32>
    %6 = arith.addf %2, %5 : vector<5x128xf32>
    %c0_4 = arith.constant 0 : index
    %c0_5 = arith.constant 0 : index
    %7 = vector.load %arg2[%c0_4, %c0_5] : memref<5x128xf32, #tpu.memory_space<vmem>>, vector<5x128xf32>
    tpu.vector_store %arg2[%c0_4, %c0_5], %6 {strides = array<i32>} : memref<5x128xf32, #tpu.memory_space<vmem>>, vector<5x128xf32>,
    return
  }
}

module attributes {stable_mosaic.version = 11 : i64} {
  func.func @_lneg_kernel(%arg0: i32, %arg1: memref<8x128xf32, #tpu.memory_space<vmem>>, %arg2: memref<256x128xbf16, #tpu.memory_space<vmem>>, %arg3: memref<8x256xf32, #tpu.memory_space<vmem>>) attributes {dimension_semantics = [#tpu.dimension_semantics<parallel>], iteration_bounds = array<i64: 4>, scalar_prefetch = 0 : i64, scratch_operands = 0 : i64, tpu.core_type = #tpu.core_type<tc>, window_params = [{pipeline_mode = #tpu.pipeline_mode<synchronous>, transform_indices = @transform_0, window_bounds = array<i64: 8, 128>}, {transform_indices = @transform_1, window_bounds = array<i64: 256, 128>}, {transform_indices = @transform_2, window_bounds = array<i64: 8, 256>}]} {
    %c0 = arith.constant 0 : index
    %c0_0 = arith.constant 0 : index
    %0 = vector.load %arg1[%c0, %c0_0] : memref<8x128xf32, #tpu.memory_space<vmem>>, vector<8x128xf32>
    %1 = arith.truncf %0 : vector<8x128xf32> to vector<8x128xbf16>
    %c0_1 = arith.constant 0 : index
    %c0_2 = arith.constant 0 : index
    %2 = vector.load %arg2[%c0_1, %c0_2] : memref<256x128xbf16, #tpu.memory_space<vmem>>, vector<256x128xbf16>
    %cst = arith.constant dense<0.000000e+00> : vector<8x256xf32>
    %3 = tpu.matmul %1, %2, %cst {dimension_numbers = #tpu.dot_dimension_numbers<[1], [1], [0], [0], [0, 0, 1, 0], [], []>} : vector<8x128xbf16>, vector<256x128xbf16>, vector<8x256xf32> -> vector<8x256xf32>
    %cst_3 = arith.constant 14.2857141 : f32
    %4 = vector.broadcast %cst_3 : f32 to vector<8x256xf32>
    %5 = arith.mulf %3, %4 : vector<8x256xf32>
    %c0_4 = arith.constant 0 : index
    %c0_5 = arith.constant 0 : index
    %6 = vector.load %arg3[%c0_4, %c0_5] : memref<8x256xf32, #tpu.memory_space<vmem>>, vector<8x256xf32>
    tpu.vector_store %arg3[%c0_4, %c0_5], %5 {strides = array<i32>} : memref<8x256xf32, #tpu.memory_space<vmem>>, vector<8x256xf32>,
    return
  }
  func.func @transform_0(%arg0: i32) -> (i32, i32) {
    %c0_i32 = arith.constant 0 : i32
    %c0_i32_0 = arith.constant 0 : i32
    %c0_i32_1 = arith.constant 0 : i32
    return %c0_i32, %c0_i32_0 : i32, i32
  }
  func.func @transform_1(%arg0: i32) -> (i32, i32) {
    %c0_i32 = arith.constant 0 : i32
    %c0_i32_0 = arith.constant 0 : i32
    return %arg0, %c0_i32 : i32, i32
  }
  func.func @transform_2(%arg0: i32) -> (i32, i32) {
    %c0_i32 = arith.constant 0 : i32
    %c0_i32_0 = arith.constant 0 : i32
    return %c0_i32, %arg0 : i32, i32
  }
}

module attributes {stable_mosaic.version = 11 : i64} {
  func.func @_encoder_kernel(%arg0: i32, %arg1: memref<1x8x1024xf32, #tpu.memory_space<vmem>>, %arg2: memref<1x1024x128xf32, #tpu.memory_space<vmem>>, %arg3: memref<1x1x128xf32, #tpu.memory_space<vmem>>, %arg4: memref<1x8x128xf32, #tpu.memory_space<vmem>>) attributes {dimension_semantics = [#tpu.dimension_semantics<parallel>], iteration_bounds = array<i64: 2>, scalar_prefetch = 0 : i64, scratch_operands = 0 : i64, tpu.core_type = #tpu.core_type<tc>, window_params = [{transform_indices = @transform_0, window_bounds = array<i64: 1, 8, 1024>}, {transform_indices = @transform_1, window_bounds = array<i64: 1, 1024, 128>}, {transform_indices = @transform_2, window_bounds = array<i64: 1, 1, 128>}, {transform_indices = @transform_3, window_bounds = array<i64: 1, 8, 128>}]} {
    %c0 = arith.constant 0 : index
    %c0_0 = arith.constant 0 : index
    %c0_1 = arith.constant 0 : index
    %0 = vector.load %arg1[%c0, %c0_0, %c0_1] : memref<1x8x1024xf32, #tpu.memory_space<vmem>>, vector<1x8x1024xf32>
    %1 = vector.shape_cast %0 : vector<1x8x1024xf32> to vector<8x1024xf32>
    %c0_2 = arith.constant 0 : index
    %c0_3 = arith.constant 0 : index
    %c0_4 = arith.constant 0 : index
    %2 = vector.load %arg2[%c0_2, %c0_3, %c0_4] : memref<1x1024x128xf32, #tpu.memory_space<vmem>>, vector<1x1024x128xf32>
    %3 = vector.shape_cast %2 : vector<1x1024x128xf32> to vector<1024x128xf32>
    %cst = arith.constant dense<0.000000e+00> : vector<8x128xf32>
    %4 = tpu.matmul %1, %3, %cst {dimension_numbers = #tpu.dot_dimension_numbers<[1], [0], [0], [1], [0, 0, 1, 1], [], []>} : vector<8x1024xf32>, vector<1024x128xf32>, vector<8x128xf32> -> vector<8x128xf32>
    %c0_5 = arith.constant 0 : index
    %c0_6 = arith.constant 0 : index
    %c0_7 = arith.constant 0 : index
    %5 = vector.load %arg3[%c0_5, %c0_6, %c0_7] : memref<1x1x128xf32, #tpu.memory_space<vmem>>, vector<1x1x128xf32>
    %6 = vector.shape_cast %5 : vector<1x1x128xf32> to vector<1x128xf32>
    %7 = vector.broadcast %6 : vector<1x128xf32> to vector<8x128xf32>
    %8 = arith.addf %4, %7 : vector<8x128xf32>
    %9 = arith.mulf %8, %8 : vector<8x128xf32>
    %cst_8 = arith.constant dense<0.000000e+00> : vector<8xf32>
    %10 = vector.multi_reduction <add>, %9, %cst_8 [1] : vector<8x128xf32> to vector<8xf32>
    %11 = vector.shape_cast %10 : vector<8xf32> to vector<8x1xf32>
    %cst_9 = arith.constant 1.000000e-24 : f32
    %12 = vector.broadcast %cst_9 : f32 to vector<8x1xf32>
    %13 = arith.maximumf %11, %12 : vector<8x1xf32>
    %14 = math.rsqrt %13 : vector<8x1xf32>
    %15 = vector.broadcast %14 : vector<8x1xf32> to vector<8x128xf32>
    %16 = arith.mulf %8, %15 : vector<8x128xf32>
    %c0_10 = arith.constant 0 : index
    %c0_11 = arith.constant 0 : index
    %c0_12 = arith.constant 0 : index
    %17 = vector.load %arg4[%c0_10, %c0_11, %c0_12] : memref<1x8x128xf32, #tpu.memory_space<vmem>>, vector<1x8x128xf32>
    %18 = vector.shape_cast %17 : vector<1x8x128xf32> to vector<8x128xf32>
    %19 = vector.shape_cast %16 : vector<8x128xf32> to vector<1x8x128xf32>
    tpu.vector_store %arg4[%c0_10, %c0_11, %c0_12], %19 {strides = array<i32>} : memref<1x8x128xf32, #tpu.memory_space<vmem>>, vector<1x8x128xf32>,
    return
  }
  func.func @transform_0(%arg0: i32) -> (i32, i32, i32) {
    %c0_i32 = arith.constant 0 : i32
    %c0_i32_0 = arith.constant 0 : i32
    %c0_i32_1 = arith.constant 0 : i32
    return %arg0, %c0_i32, %c0_i32_0 : i32, i32, i32
  }
  func.func @transform_1(%arg0: i32) -> (i32, i32, i32) {
    %c0_i32 = arith.constant 0 : i32
    %c0_i32_0 = arith.constant 0 : i32
    %c0_i32_1 = arith.constant 0 : i32
    return %arg0, %c0_i32, %c0_i32_0 : i32, i32, i32
  }
  func.func @transform_2(%arg0: i32) -> (i32, i32, i32) {
    %c0_i32 = arith.constant 0 : i32
    %c0_i32_0 = arith.constant 0 : i32
    %c0_i32_1 = arith.constant 0 : i32
    return %arg0, %c0_i32, %c0_i32_0 : i32, i32, i32
  }
  func.func @transform_3(%arg0: i32) -> (i32, i32, i32) {
    %c0_i32 = arith.constant 0 : i32
    %c0_i32_0 = arith.constant 0 : i32
    %c0_i32_1 = arith.constant 0 : i32
    return %arg0, %c0_i32, %c0_i32_0 : i32, i32, i32
  }
}

</mosaic_0001>

<llo_original>
// kernel: moco_forward.3
$region0: #{moco_forward.3}
  #allocation0 [shape = 'u32[]', space=smem, size = 0x4, offset = 0x4, fixed_abs, tag = 'smem constant byte address 0x4 - core index']
  #allocation1 [shape = 'u32[144,128]{1,0:T(1,128)}', space=vmem, size = 0x12000, scoped, tag = 'internal scratch']
  %s0 = inlined_call_operand.vmem [shape: f32[5,128], index: 0, kind: input, shape index: {}, may-alias: {0,2}]
  %s1 = inlined_call_operand.vmem [shape: f32[5,128], index: 1, kind: input, shape index: {}]
  %s2 = inlined_call_operand.vmem [shape: f32[5,128], index: 2, kind: output, shape index: {}, may-alias: {0,2}]
  %s3 = sld [smem:[#allocation0]]
  $region18: #{moco_forward.3} parent=0
    _
  %s5 = ssub.s32 1, %s3
  %s6 = scalar_select 0, %s5, %s3
  // Predicated region
  $region2: #{moco_forward.3} parent=0 // pred_check
    _
  $region3: #{moco_forward.3} parent=0 // pred_check_branch
    %8 = sbr.rel (0) target = $region5
  $region4: #{moco_forward.3} parent=0 // pred_region
    _
  $region5: #{moco_forward.3} parent=0 // pred_fallthru
    _
  // Predicated region
  $region6: #{moco_forward.3} parent=0 // pred_check
    _
  $region7: #{moco_forward.3} parent=0 // pred_check_branch
    %10 = sbr.rel (0) target = $region9
  $region8: #{moco_forward.3} parent=0 // pred_region
    _
  $region9: #{moco_forward.3} parent=0 // pred_fallthru
    _
  %v11 = vld [vmem:[%s0] sm:$0x1f]
  %v12 = vmul.f32 %v11, 0.999
  %v13 = vld [vmem:[%s1] sm:$0x1f]
  %v14 = vmul.f32 %v13, 0.001
  %v15 = vadd.f32 %v12, %v14
  %16 = vst [vmem:[%s2] sm:$0x1f] %v15
  // Predicated region
  $region10: #{moco_forward.3} parent=0 // pred_check
    _
  $region11: #{moco_forward.3} parent=0 // pred_check_branch
    %18 = sbr.rel (0) target = $region13
  $region12: #{moco_forward.3} parent=0 // pred_region
    _
  $region13: #{moco_forward.3} parent=0 // pred_fallthru
    _
  // Predicated region
  $region14: #{moco_forward.3} parent=0 // pred_check
    _
  $region15: #{moco_forward.3} parent=0 // pred_check_branch
    %20 = sbr.rel (0) target = $region17
  $region16: #{moco_forward.3} parent=0 // pred_region
    _
  $region17: #{moco_forward.3} parent=0 // pred_fallthru
    _

// kernel: moco_forward.5
$region0: #{moco_forward.5}
  #allocation0 [shape = 'u32[]', space=smem, size = 0x4, offset = 0x4, fixed_abs, tag = 'smem constant byte address 0x4 - core index']
  #allocation1 [shape = 'u32[144,128]{1,0:T(1,128)}', space=vmem, size = 0x12000, scoped, tag = 'internal scratch']
  %s0 = inlined_call_operand.vmem [shape: f32[8,128], index: 0, kind: input, shape index: {}]
  %s1 = inlined_call_operand.vmem [shape: bf16[1024,128], index: 1, kind: input, shape index: {}]
  %s2 = inlined_call_operand.vmem [shape: f32[8,1024], index: 2, kind: output, shape index: {}]
  %s3 = sld [smem:[#allocation0]]
  $region41: #{moco_forward.5} parent=0
    _
  %s5 = ssub.s32 1, %s3
  %s6 = scalar_select 0, %s5, %s3
  loop: start=0, step=1, limit=6
  $region2: #{moco_forward.5} parent=0 // loop_pre_header
    _
  $region3: #{moco_forward.5} parent=0 // loop_header
    %s8 = sphi 0, %s12
    %p9 = scmp.ge.s32.totalorder %s8, 6
    %s16 = sphi 0, %s16
    %s18 = sphi 0, %s16
    %s19 = sphi 0, %s18
    %s33 = sphi 0, %s19
    %s39 = sphi 0, %s41
    %s42 = sphi 0, %s39
    %s43 = sphi 0, %s42
    %s59 = sphi 0, %s43
    %s65 = sphi 0, %s67
    %s68 = sphi 0, %s65
    %s69 = sphi 0, %s68
    %s85 = sphi 0, %s69
  $region4: #{moco_forward.5} parent=0 // loop_header_branch
    %11 = sbr.rel (%p9) target = $region8
  $region5: #{moco_forward.5} parent=0 // loop_body
    %s13 = ssub.s32 %s8, 1
    %s14 = ssub.s32 %s8, 2
    %s15 = sadd.s32 %s8, 1
    %s17 = sadd.s32 %s16, 1
    %p20 = scmp.eq.s32.totalorder %s8, 3
    %p21 = scmp.ne.s32.totalorder %s16, %s18
    %p22 = scmp.eq.s32.totalorder %s8, 0
    %p23 = por %p21, %p22
    %p24 = scmp.ne.s32.totalorder %s16, %s18
    %p25 = scmp.eq.s32.totalorder %s13, 3
    %p26 = por %p24, %p25
    %p27 = scmp.ne.s32.totalorder %s18, %s19
    %p28 = scmp.eq.s32.totalorder %s13, 0
    %p29 = por %p27, %p28
    %p30 = scmp.ne.s32.totalorder %s18, %s19
    %p31 = scmp.eq.s32.totalorder %s14, 3
    %p32 = por %p30, %p31
    %p34 = scmp.ne.s32.totalorder %s19, %s33
    %p35 = scmp.eq.s32.totalorder %s14, 0
    %p36 = por %p34, %p35
    %s37 = ssub.s32 %s8, %s15
    %p38 = scmp.eq.s32.totalorder %s37, 0
    %s40 = sadd.s32 %s39, 1
    %s41 = scalar_select %p38, %s39, %s40
    %p44 = pneg %p38
    %p45 = scmp.eq.s32.totalorder %s8, 3
    %p46 = por %p44, %p45
    %p47 = scmp.ne.s32.totalorder %s39, %s42
    %p48 = scmp.eq.s32.totalorder %s8, 0
    %p49 = por %p47, %p48
    %p50 = scmp.ne.s32.totalorder %s39, %s42
    %p51 = scmp.eq.s32.totalorder %s13, 3
    %p52 = por %p50, %p51
    %p53 = scmp.ne.s32.totalorder %s42, %s43
    %p54 = scmp.eq.s32.totalorder %s13, 0
    %p55 = por %p53, %p54
    %p56 = scmp.ne.s32.totalorder %s42, %s43
    %p57 = scmp.eq.s32.totalorder %s14, 3
    %p58 = por %p56, %p57
    %p60 = scmp.ne.s32.totalorder %s43, %s59
    %p61 = scmp.eq.s32.totalorder %s14, 0
    %p62 = por %p60, %p61
    %s63 = ssub.s32 %s8, %s15
    %p64 = scmp.eq.s32.totalorder %s63, 0
    %s66 = sadd.s32 %s65, 1
    %s67 = scalar_select %p64, %s65, %s66
    %p70 = pneg %p64
    %p71 = scmp.eq.s32.totalorder %s8, 3
    %p72 = por %p70, %p71
    %p73 = scmp.ne.s32.totalorder %s65, %s68
    %p74 = scmp.eq.s32.totalorder %s8, 0
    %p75 = por %p73, %p74
    %p76 = scmp.ne.s32.totalorder %s65, %s68
    %p77 = scmp.eq.s32.totalorder %s13, 3
    %p78 = por %p76, %p77
    %p79 = scmp.ne.s32.totalorder %s68, %s69
    %p80 = scmp.eq.s32.totalorder %s13, 0
    %p81 = por %p79, %p80
    %p82 = scmp.ne.s32.totalorder %s68, %s69
    %p83 = scmp.eq.s32.totalorder %s14, 3
    %p84 = por %p82, %p83
    %p86 = scmp.ne.s32.totalorder %s69, %s85
    %p87 = scmp.eq.s32.totalorder %s14, 0
    %p88 = por %p86, %p87
    %p89 = scmp.le.s32.totalorder 1, %s8
    %p90 = scmp.lt.s32.totalorder %s8, 5
    %p91 = pnand %p89, %p90
    %p92 = pneg %p91
    // Predicated region
    $region9: #{moco_forward.5} parent=5 // pred_check
      _
    $region10: #{moco_forward.5} parent=5 // pred_check_branch
      %94 = sbr.rel (%p91) target = $region12
    $region11: #{moco_forward.5} parent=5 // pred_region
      %s95 = ssub.s32 %s8, 1
      // Predicated region
      $region13: #{moco_forward.5} parent=11 // pred_check
        %p96 = pneg %p29
      $region14: #{moco_forward.5} parent=11 // pred_check_branch
        %98 = sbr.rel (%p96) target = $region16
      $region15: #{moco_forward.5} parent=11 // pred_region
        _
      $region16: #{moco_forward.5} parent=11 // pred_fallthru
        _
    $region12: #{moco_forward.5} parent=5 // pred_fallthru
      _
    %p99 = scmp.lt.s32.totalorder %s8, 4
    // Predicated region
    $region17: #{moco_forward.5} parent=5 // pred_check
      %p100 = pneg %p99
    $region18: #{moco_forward.5} parent=5 // pred_check_branch
      %102 = sbr.rel (%p100) target = $region20
    $region19: #{moco_forward.5} parent=5 // pred_region
      // Predicated region
      $region21: #{moco_forward.5} parent=19 // pred_check
        %p103 = pneg %p49
      $region22: #{moco_forward.5} parent=19 // pred_check_branch
        %105 = sbr.rel (%p103) target = $region24
      $region23: #{moco_forward.5} parent=19 // pred_region
        %s106 = smul.u32 32, %s8
        %p107 = scmp.lt.s32.totalorder %s106, 127
        %s108 = scalar_select %p107, %s106, 127
        %s109 = smul.addr %s108, 4
        %s110 = scalar_lea.vmem %s1, %s109
        %s111 = smul.u32 32, %s8
      $region24: #{moco_forward.5} parent=19 // pred_fallthru
        _
    $region20: #{moco_forward.5} parent=5 // pred_fallthru
      _
    %p112 = scmp.le.s32.totalorder 1, %s8
    %p113 = scmp.lt.s32.totalorder %s8, 5
    %p114 = pnand %p112, %p113
    %p115 = pneg %p114
    // Predicated region
    $region25: #{moco_forward.5} parent=5 // pred_check
      _
    $region26: #{moco_forward.5} parent=5 // pred_check_branch
      %117 = sbr.rel (%p114) target = $region28
    $region27: #{moco_forward.5} parent=5 // pred_region
      %s118 = ssub.s32 %s8, 1
      %p119 = pneg %p29
      %p120 = pneg %p26
      %s121 = smul.u32 32, %s13
      %p122 = scmp.lt.s32.totalorder %s121, 127
      %s123 = scalar_select %p122, %s121, 127
      %s124 = smul.addr %s123, 4
      %s125 = scalar_lea.vmem %s1, %s124
      %p126 = pneg %p55
      %p127 = pneg %p52
      %p128 = pneg %p81
      %p129 = pneg %p78
      %s130 = smul.u32 2, %s13
      %p131 = scmp.lt.s32.totalorder %s130, 7
      %s132 = scalar_select %p131, %s130, 7
      %s133 = smul.addr %s132, 8
      %s134 = scalar_lea.vmem %s2, %s133
      %s135 = smul.u32 32, %s13
      %p136 = scmp.lt.s32.totalorder %s135, 127
      %s137 = scalar_select %p136, %s135, 127
      %s138 = smul.addr %s137, 4
      %s139 = scalar_lea.vmem %s1, %s138
      %s140 = smul.u32 32, %s13
      %s141 = smul.u32 2, %s13
      %p142 = scmp.lt.s32.totalorder %s141, 7
      %s143 = scalar_select %p142, %s141, 7
      %s144 = smul.addr %s143, 8
      %s145 = scalar_lea.vmem %s2, %s144
      %s146 = smul.u32 2, %s13
      %v148 = vld [vmem:[%s0] sm:$0xff]
      %v149 = vpack.c.bf16 %v148, %v148
      %v150 = vld [vmem:[%s139] sm:$0xf]
      %v151 = vld [vmem:[%s139 + $0x4] sm:$0xf]
      %v152 = vld [vmem:[%s139 + $0x8] sm:$0xf]
      %v153 = vld [vmem:[%s139 + $0xc] sm:$0xf]
      %v154 = vld [vmem:[%s139 + $0x10] sm:$0xf]
      %v155 = vld [vmem:[%s139 + $0x14] sm:$0xf]
      %v156 = vld [vmem:[%s139 + $0x18] sm:$0xf]
      %v157 = vld [vmem:[%s139 + $0x1c] sm:$0xf]
      %v158 = vld [vmem:[%s139 + $0x20] sm:$0xf]
      %v159 = vld [vmem:[%s139 + $0x24] sm:$0xf]
      %v160 = vld [vmem:[%s139 + $0x28] sm:$0xf]
      %v161 = vld [vmem:[%s139 + $0x2c] sm:$0xf]
      %v162 = vld [vmem:[%s139 + $0x30] sm:$0xf]
      %v163 = vld [vmem:[%s139 + $0x34] sm:$0xf]
      %v164 = vld [vmem:[%s139 + $0x38] sm:$0xf]
      %v165 = vld [vmem:[%s139 + $0x3c] sm:$0xf]
      %v166 = vld [vmem:[%s139 + $0x40] sm:$0xf]
      %v167 = vld [vmem:[%s139 + $0x44] sm:$0xf]
      %v168 = vld [vmem:[%s139 + $0x48] sm:$0xf]
      %v169 = vld [vmem:[%s139 + $0x4c] sm:$0xf]
      %v170 = vld [vmem:[%s139 + $0x50] sm:$0xf]
      %v171 = vld [vmem:[%s139 + $0x54] sm:$0xf]
      %v172 = vld [vmem:[%s139 + $0x58] sm:$0xf]
      %v173 = vld [vmem:[%s139 + $0x5c] sm:$0xf]
      %v174 = vld [vmem:[%s139 + $0x60] sm:$0xf]
      %v175 = vld [vmem:[%s139 + $0x64] sm:$0xf]
      %v176 = vld [vmem:[%s139 + $0x68] sm:$0xf]
      %v177 = vld [vmem:[%s139 + $0x6c] sm:$0xf]
      %v178 = vld [vmem:[%s139 + $0x70] sm:$0xf]
      %v179 = vld [vmem:[%s139 + $0x74] sm:$0xf]
      %v180 = vld [vmem:[%s139 + $0x78] sm:$0xf]
      %v181 = vld [vmem:[%s139 + $0x7c] sm:$0xf]
      %v214 = vunpack.c.l.b16 %v150
      %v215 = vunpack.c.l.b16 %v151
      %v216 = vunpack.c.l.b16 %v152
      %v217 = vunpack.c.l.b16 %v153
      %v218 = vunpack.c.l.b16 %v154
      %v219 = vunpack.c.l.b16 %v155
      %v220 = vunpack.c.l.b16 %v156
      %v221 = vunpack.c.l.b16 %v157
      %v222 = vunpack.c.l.b16 %v158
      %v223 = vunpack.c.l.b16 %v159
      %v224 = vunpack.c.l.b16 %v160
      %v225 = vunpack.c.l.b16 %v161
      %v226 = vunpack.c.l.b16 %v162
      %v227 = vunpack.c.l.b16 %v163
      %v228 = vunpack.c.l.b16 %v164
      %v229 = vunpack.c.l.b16 %v165
      %v230 = vunpack.c.l.b16 %v166
      %v231 = vunpack.c.l.b16 %v167
      %v232 = vunpack.c.l.b16 %v168
      %v233 = vunpack.c.l.b16 %v169
      %v234 = vunpack.c.l.b16 %v170
      %v235 = vunpack.c.l.b16 %v171
      %v236 = vunpack.c.l.b16 %v172
      %v237 = vunpack.c.l.b16 %v173
      %v238 = vunpack.c.l.b16 %v174
      %v239 = vunpack.c.l.b16 %v175
      %v240 = vunpack.c.l.b16 %v176
      %v241 = vunpack.c.l.b16 %v177
      %v242 = vunpack.c.l.b16 %v178
      %v243 = vunpack.c.l.b16 %v179
      %v244 = vunpack.c.l.b16 %v180
      %v245 = vunpack.c.l.b16 %v181
      %v246 = vpack.c.b16 %v215, %v214
      %v247 = vpack.c.b16 %v217, %v216
      %v248 = vpack.c.b16 %v219, %v218
      %v249 = vpack.c.b16 %v221, %v220
      %v250 = vpack.c.b16 %v223, %v222
      %v251 = vpack.c.b16 %v225, %v224
      %v252 = vpack.c.b16 %v227, %v226
      %v253 = vpack.c.b16 %v229, %v228
      %v254 = vpack.c.b16 %v231, %v230
      %v255 = vpack.c.b16 %v233, %v232
      %v256 = vpack.c.b16 %v235, %v234
      %v257 = vpack.c.b16 %v237, %v236
      %v258 = vpack.c.b16 %v239, %v238
      %v259 = vpack.c.b16 %v241, %v240
      %v260 = vpack.c.b16 %v243, %v242
      %v261 = vpack.c.b16 %v245, %v244
      %278 = vmatprep.subr.bf16.mxu0 0
      %279 = vmatpush1.bf16.xpose.msra.mxu0 %v253
      %280 = vmatprep.subr.bf16.mxu0 0
      %281 = vmatpush1.bf16.xpose.msra.mxu0 %v252
      %282 = vmatprep.subr.bf16.mxu0 0
      %283 = vmatpush1.bf16.xpose.msra.mxu0 %v251
      %284 = vmatprep.subr.bf16.mxu0 0
      %285 = vmatpush1.bf16.xpose.msra.mxu0 %v250
      %286 = vmatprep.subr.bf16.mxu0 0
      %287 = vmatpush1.bf16.xpose.msra.mxu0 %v249
      %288 = vmatprep.subr.bf16.mxu0 0
      %289 = vmatpush1.bf16.xpose.msra.mxu0 %v248
      %290 = vmatprep.subr.bf16.mxu0 0
      %291 = vmatpush1.bf16.xpose.msra.mxu0 %v247
      %292 = vmatprep.subr.bf16.mxu0 0
      %293 = vmatpush1.bf16.xpose.msra.mxu0 %v246
      %294 = vmatprep.subr.bf16.mxu0 0
      %295 = vmatpush2.bf16.xpose.msra.mxu0 %v261
      %296 = vmatprep.subr.bf16.mxu0 0
      %297 = vmatpush2.bf16.xpose.msra.mxu0 %v260
      %298 = vmatprep.subr.bf16.mxu0 0
      %299 = vmatpush2.bf16.xpose.msra.mxu0 %v259
      %300 = vmatprep.subr.bf16.mxu0 0
      %301 = vmatpush2.bf16.xpose.msra.mxu0 %v258
      %302 = vmatprep.subr.bf16.mxu0 0
      %303 = vmatpush2.bf16.xpose.msra.mxu0 %v257
      %304 = vmatprep.subr.bf16.mxu0 0
      %305 = vmatpush2.bf16.xpose.msra.mxu0 %v256
      %306 = vmatprep.subr.bf16.mxu0 0
      %307 = vmatpush2.bf16.xpose.msra.mxu0 %v255
      %308 = vmatprep.subr.bf16.mxu0 0
      %309 = vmatpush2.bf16.xpose.msra.mxu0 %v254
      %310 = vmatprep.mubr.bf16.mxu0 0
      %311 = vmatmul.mubr.bf16.gmra.mxu0 %v149
      %v312 = vpop.f32.mrf.mxu0
      %v313 = vadd.f32 0.0, %v312
      %v314 = vpop.f32.mrf.mxu0
      %v315 = vadd.f32 0.0, %v314
      %v316 = vpop.f32.mrf.mxu0
      %v317 = vpop.f32.mrf.mxu0
      %318 = vdwg.mxu0
      %v319 = vmul.f32 %v313, 14.285714
      %v320 = vmul.f32 %v315, 14.285714
      %321 = vst [vmem:[%s145] sm:$0xff] %v319
      %322 = vst [vmem:[%s145 + $0x8] sm:$0xff] %v320
      %s323 = smul.u32 2, %s13
      %p324 = scmp.lt.s32.totalorder %s323, 7
      %s325 = scalar_select %p324, %s323, 7
      %s326 = smul.addr %s325, 8
      %s327 = scalar_lea.vmem %s2, %s326
      // Predicated region
      $region29: #{moco_forward.5} parent=27 // pred_check
        %p328 = pneg %p78
      $region30: #{moco_forward.5} parent=27 // pred_check_branch
        %330 = sbr.rel (%p328) target = $region32
      $region31: #{moco_forward.5} parent=27 // pred_region
        %s331 = smul.u32 2, %s13
      $region32: #{moco_forward.5} parent=27 // pred_fallthru
        _
    $region28: #{moco_forward.5} parent=5 // pred_fallthru
      _
    %p332 = scmp.le.s32.totalorder 2, %s8
    // Predicated region
    $region33: #{moco_forward.5} parent=5 // pred_check
      %p333 = pneg %p332
    $region34: #{moco_forward.5} parent=5 // pred_check_branch
      %335 = sbr.rel (%p333) target = $region36
    $region35: #{moco_forward.5} parent=5 // pred_region
      %s336 = ssub.s32 %s8, 2
      // Predicated region
      $region37: #{moco_forward.5} parent=35 // pred_check
        %p337 = pneg %p84
      $region38: #{moco_forward.5} parent=35 // pred_check_branch
        %339 = sbr.rel (%p337) target = $region40
      $region39: #{moco_forward.5} parent=35 // pred_region
        %s340 = smul.u32 2, %s14
        %p341 = scmp.lt.s32.totalorder %s340, 7
        %s342 = scalar_select %p341, %s340, 7
        %s343 = smul.addr %s342, 8
        %s344 = scalar_lea.vmem %s2, %s343
      $region40: #{moco_forward.5} parent=35 // pred_fallthru
        _
    $region36: #{moco_forward.5} parent=5 // pred_fallthru
      _
  $region6: #{moco_forward.5} parent=0 // loop_footer
    %s12 = sadd.s32 1, %s8
  $region7: #{moco_forward.5} parent=0 // loop_footer_branch
    %7 = sbr.rel target = $region3
  $region8: #{moco_forward.5} parent=0 // loop_exit
    _

// kernel: moco_forward.4
$region0: #{moco_forward.4}
  #allocation0 [shape = 'u32[]', space=smem, size = 0x4, offset = 0x4, fixed_abs, tag = 'smem constant byte address 0x4 - core index']
  #allocation1 [shape = 'u32[144,128]{1,0:T(1,128)}', space=vmem, size = 0x12000, scoped, tag = 'internal scratch']
  %s0 = inlined_call_operand.vmem [shape: f32[2,8,1024], index: 0, kind: input, shape index: {}]
  %s1 = inlined_call_operand.vmem [shape: f32[2,1024,128], index: 1, kind: input, shape index: {}]
  %s2 = inlined_call_operand.vmem [shape: f32[2,1,128], index: 2, kind: input, shape index: {}]
  %s3 = inlined_call_operand.vmem [shape: f32[2,8,128], index: 3, kind: output, shape index: {}]
  %s4 = sld [smem:[#allocation0]]
  $region45: #{moco_forward.4} parent=0
    _
  %s6 = ssub.s32 1, %s4
  %s7 = scalar_select 0, %s6, %s4
  loop: start=0, step=1, limit=4
  $region2: #{moco_forward.4} parent=0 // loop_pre_header
    _
  $region3: #{moco_forward.4} parent=0 // loop_header
    %s9 = sphi 0, %s13
    %p10 = scmp.ge.s32.totalorder %s9, 4
    %s19 = sphi 0, %s21
    %s22 = sphi 0, %s19
    %s23 = sphi 0, %s22
    %s39 = sphi 0, %s23
    %s45 = sphi 0, %s47
    %s48 = sphi 0, %s45
    %s49 = sphi 0, %s48
    %s65 = sphi 0, %s49
    %s71 = sphi 0, %s73
    %s74 = sphi 0, %s71
    %s75 = sphi 0, %s74
    %s91 = sphi 0, %s75
    %s97 = sphi 0, %s99
    %s100 = sphi 0, %s97
    %s101 = sphi 0, %s100
    %s117 = sphi 0, %s101
  $region4: #{moco_forward.4} parent=0 // loop_header_branch
    %12 = sbr.rel (%p10) target = $region8
  $region5: #{moco_forward.4} parent=0 // loop_body
    %s14 = ssub.s32 %s9, 1
    %s15 = ssub.s32 %s9, 2
    %s16 = sadd.s32 %s9, 1
    %s17 = ssub.s32 %s9, %s16
    %p18 = scmp.eq.s32.totalorder %s17, 0
    %s20 = sadd.s32 %s19, 1
    %s21 = scalar_select %p18, %s19, %s20
    %p24 = pneg %p18
    %p25 = scmp.eq.s32.totalorder %s9, 1
    %p26 = por %p24, %p25
    %p27 = scmp.ne.s32.totalorder %s19, %s22
    %p28 = scmp.eq.s32.totalorder %s9, 0
    %p29 = por %p27, %p28
    %p30 = scmp.ne.s32.totalorder %s19, %s22
    %p31 = scmp.eq.s32.totalorder %s14, 1
    %p32 = por %p30, %p31
    %p33 = scmp.ne.s32.totalorder %s22, %s23
    %p34 = scmp.eq.s32.totalorder %s14, 0
    %p35 = por %p33, %p34
    %p36 = scmp.ne.s32.totalorder %s22, %s23
    %p37 = scmp.eq.s32.totalorder %s15, 1
    %p38 = por %p36, %p37
    %p40 = scmp.ne.s32.totalorder %s23, %s39
    %p41 = scmp.eq.s32.totalorder %s15, 0
    %p42 = por %p40, %p41
    %s43 = ssub.s32 %s9, %s16
    %p44 = scmp.eq.s32.totalorder %s43, 0
    %s46 = sadd.s32 %s45, 1
    %s47 = scalar_select %p44, %s45, %s46
    %p50 = pneg %p44
    %p51 = scmp.eq.s32.totalorder %s9, 1
    %p52 = por %p50, %p51
    %p53 = scmp.ne.s32.totalorder %s45, %s48
    %p54 = scmp.eq.s32.totalorder %s9, 0
    %p55 = por %p53, %p54
    %p56 = scmp.ne.s32.totalorder %s45, %s48
    %p57 = scmp.eq.s32.totalorder %s14, 1
    %p58 = por %p56, %p57
    %p59 = scmp.ne.s32.totalorder %s48, %s49
    %p60 = scmp.eq.s32.totalorder %s14, 0
    %p61 = por %p59, %p60
    %p62 = scmp.ne.s32.totalorder %s48, %s49
    %p63 = scmp.eq.s32.totalorder %s15, 1
    %p64 = por %p62, %p63
    %p66 = scmp.ne.s32.totalorder %s49, %s65
    %p67 = scmp.eq.s32.totalorder %s15, 0
    %p68 = por %p66, %p67
    %s69 = ssub.s32 %s9, %s16
    %p70 = scmp.eq.s32.totalorder %s69, 0
    %s72 = sadd.s32 %s71, 1
    %s73 = scalar_select %p70, %s71, %s72
    %p76 = pneg %p70
    %p77 = scmp.eq.s32.totalorder %s9, 1
    %p78 = por %p76, %p77
    %p79 = scmp.ne.s32.totalorder %s71, %s74
    %p80 = scmp.eq.s32.totalorder %s9, 0
    %p81 = por %p79, %p80
    %p82 = scmp.ne.s32.totalorder %s71, %s74
    %p83 = scmp.eq.s32.totalorder %s14, 1
    %p84 = por %p82, %p83
    %p85 = scmp.ne.s32.totalorder %s74, %s75
    %p86 = scmp.eq.s32.totalorder %s14, 0
    %p87 = por %p85, %p86
    %p88 = scmp.ne.s32.totalorder %s74, %s75
    %p89 = scmp.eq.s32.totalorder %s15, 1
    %p90 = por %p88, %p89
    %p92 = scmp.ne.s32.totalorder %s75, %s91
    %p93 = scmp.eq.s32.totalorder %s15, 0
    %p94 = por %p92, %p93
    %s95 = ssub.s32 %s9, %s16
    %p96 = scmp.eq.s32.totalorder %s95, 0
    %s98 = sadd.s32 %s97, 1
    %s99 = scalar_select %p96, %s97, %s98
    %p102 = pneg %p96
    %p103 = scmp.eq.s32.totalorder %s9, 1
    %p104 = por %p102, %p103
    %p105 = scmp.ne.s32.totalorder %s97, %s100
    %p106 = scmp.eq.s32.totalorder %s9, 0
    %p107 = por %p105, %p106
    %p108 = scmp.ne.s32.totalorder %s97, %s100
    %p109 = scmp.eq.s32.totalorder %s14, 1
    %p110 = por %p108, %p109
    %p111 = scmp.ne.s32.totalorder %s100, %s101
    %p112 = scmp.eq.s32.totalorder %s14, 0
    %p113 = por %p111, %p112
    %p114 = scmp.ne.s32.totalorder %s100, %s101
    %p115 = scmp.eq.s32.totalorder %s15, 1
    %p116 = por %p114, %p115
    %p118 = scmp.ne.s32.totalorder %s101, %s117
    %p119 = scmp.eq.s32.totalorder %s15, 0
    %p120 = por %p118, %p119
    %p121 = scmp.le.s32.totalorder 1, %s9
    %p122 = scmp.lt.s32.totalorder %s9, 3
    %p123 = pnand %p121, %p122
    %p124 = pneg %p123
    // Predicated region
    $region9: #{moco_forward.4} parent=5 // pred_check
      _
    $region10: #{moco_forward.4} parent=5 // pred_check_branch
      %126 = sbr.rel (%p123) target = $region12
    $region11: #{moco_forward.4} parent=5 // pred_region
      %s127 = ssub.s32 %s9, 1
    $region12: #{moco_forward.4} parent=5 // pred_fallthru
      _
    %p128 = scmp.lt.s32.totalorder %s9, 2
    // Predicated region
    $region13: #{moco_forward.4} parent=5 // pred_check
      %p129 = pneg %p128
    $region14: #{moco_forward.4} parent=5 // pred_check_branch
      %131 = sbr.rel (%p129) target = $region16
    $region15: #{moco_forward.4} parent=5 // pred_region
      // Predicated region
      $region17: #{moco_forward.4} parent=15 // pred_check
        %p132 = pneg %p29
      $region18: #{moco_forward.4} parent=15 // pred_check_branch
        %134 = sbr.rel (%p132) target = $region20
      $region19: #{moco_forward.4} parent=15 // pred_region
        %p135 = scmp.lt.s32.totalorder %s9, 1
        %s136 = scalar_select %p135, %s9, 1
        %s137 = smul.addr %s136, 8
        %s138 = smul.addr %s137, 8
        %s139 = scalar_lea.vmem %s0, %s138
      $region20: #{moco_forward.4} parent=15 // pred_fallthru
        _
      // Predicated region
      $region21: #{moco_forward.4} parent=15 // pred_check
        %p140 = pneg %p55
      $region22: #{moco_forward.4} parent=15 // pred_check_branch
        %142 = sbr.rel (%p140) target = $region24
      $region23: #{moco_forward.4} parent=15 // pred_region
        %p143 = scmp.lt.s32.totalorder %s9, 1
        %s144 = scalar_select %p143, %s9, 1
        %s145 = smul.addr %s144, 128
        %s146 = smul.addr %s145, 8
        %s147 = scalar_lea.vmem %s1, %s146
      $region24: #{moco_forward.4} parent=15 // pred_fallthru
        _
      // Predicated region
      $region25: #{moco_forward.4} parent=15 // pred_check
        %p148 = pneg %p81
      $region26: #{moco_forward.4} parent=15 // pred_check_branch
        %150 = sbr.rel (%p148) target = $region28
      $region27: #{moco_forward.4} parent=15 // pred_region
        %p151 = scmp.lt.s32.totalorder %s9, 1
        %s152 = scalar_select %p151, %s9, 1
        %s153 = scalar_lea.vmem %s2, %s152
      $region28: #{moco_forward.4} parent=15 // pred_fallthru
        _
    $region16: #{moco_forward.4} parent=5 // pred_fallthru
      _
    %p154 = scmp.le.s32.totalorder 1, %s9
    %p155 = scmp.lt.s32.totalorder %s9, 3
    %p156 = pnand %p154, %p155
    %p157 = pneg %p156
    // Predicated region
    $region29: #{moco_forward.4} parent=5 // pred_check
      _
    $region30: #{moco_forward.4} parent=5 // pred_check_branch
      %159 = sbr.rel (%p156) target = $region32
    $region31: #{moco_forward.4} parent=5 // pred_region
      %s160 = ssub.s32 %s9, 1
      %p161 = scmp.lt.s32.totalorder %s14, 1
      %s162 = scalar_select %p161, %s14, 1
      %s163 = smul.addr %s162, 8
      %s164 = smul.addr %s163, 8
      %s165 = scalar_lea.vmem %s0, %s164
      %p166 = pneg %p35
      %p167 = pneg %p32
      %p168 = scmp.lt.s32.totalorder %s14, 1
      %s169 = scalar_select %p168, %s14, 1
      %s170 = smul.addr %s169, 128
      %s171 = smul.addr %s170, 8
      %s172 = scalar_lea.vmem %s1, %s171
      %p173 = pneg %p61
      %p174 = pneg %p58
      %p175 = scmp.lt.s32.totalorder %s14, 1
      %s176 = scalar_select %p175, %s14, 1
      %s177 = scalar_lea.vmem %s2, %s176
      %p178 = pneg %p87
      %p179 = pneg %p84
      %p180 = pneg %p113
      %p181 = pneg %p110
      %p182 = scmp.lt.s32.totalorder %s14, 1
      %s183 = scalar_select %p182, %s14, 1
      %s184 = smul.addr %s183, 8
      %s185 = scalar_lea.vmem %s3, %s184
      %p186 = scmp.lt.s32.totalorder %s14, 1
      %s187 = scalar_select %p186, %s14, 1
      %s188 = smul.addr %s187, 8
      %s189 = smul.addr %s188, 8
      %s190 = scalar_lea.vmem %s0, %s189
      %p191 = scmp.lt.s32.totalorder %s14, 1
      %s192 = scalar_select %p191, %s14, 1
      %s193 = smul.addr %s192, 128
      %s194 = smul.addr %s193, 8
      %s195 = scalar_lea.vmem %s1, %s194
      %p196 = scmp.lt.s32.totalorder %s14, 1
      %s197 = scalar_select %p196, %s14, 1
      %s198 = scalar_lea.vmem %s2, %s197
      %p199 = scmp.lt.s32.totalorder %s14, 1
      %s200 = scalar_select %p199, %s14, 1
      %s201 = smul.addr %s200, 8
      %s202 = scalar_lea.vmem %s3, %s201
      %v203 = vld [vmem:[%s190] sm:$0xff]
      %v204 = vld [vmem:[%s190 + $0x8] sm:$0xff]
      %v205 = vld [vmem:[%s190 + $0x10] sm:$0xff]
      %v206 = vld [vmem:[%s190 + $0x18] sm:$0xff]
      %v207 = vld [vmem:[%s190 + $0x20] sm:$0xff]
      %v208 = vld [vmem:[%s190 + $0x28] sm:$0xff]
      %v209 = vld [vmem:[%s190 + $0x30] sm:$0xff]
      %v210 = vld [vmem:[%s190 + $0x38] sm:$0xff]
      %v211 = vld [vmem:[%s195] sm:$0xff]
      %v212 = vld [vmem:[%s195 + $0x8] sm:$0xff]
      %v213 = vld [vmem:[%s195 + $0x10] sm:$0xff]
      %v214 = vld [vmem:[%s195 + $0x18] sm:$0xff]
      %v215 = vld [vmem:[%s195 + $0x20] sm:$0xff]
      %v216 = vld [vmem:[%s195 + $0x28] sm:$0xff]
      %v217 = vld [vmem:[%s195 + $0x30] sm:$0xff]
      %v218 = vld [vmem:[%s195 + $0x38] sm:$0xff]
      %v219 = vld [vmem:[%s195 + $0x40] sm:$0xff]
      %v220 = vld [vmem:[%s195 + $0x48] sm:$0xff]
      %v221 = vld [vmem:[%s195 + $0x50] sm:$0xff]
      %v222 = vld [vmem:[%s195 + $0x58] sm:$0xff]
      %v223 = vld [vmem:[%s195 + $0x60] sm:$0xff]
      %v224 = vld [vmem:[%s195 + $0x68] sm:$0xff]
      %v225 = vld [vmem:[%s195 + $0x70] sm:$0xff]
      %v226 = vld [vmem:[%s195 + $0x78] sm:$0xff]
      %v227 = vld [vmem:[%s195 + $0x80] sm:$0xff]
      %v228 = vld [vmem:[%s195 + $0x88] sm:$0xff]
      %v229 = vld [vmem:[%s195 + $0x90] sm:$0xff]
      %v230 = vld [vmem:[%s195 + $0x98] sm:$0xff]
      %v231 = vld [vmem:[%s195 + $0xa0] sm:$0xff]
      %v232 = vld [vmem:[%s195 + $0xa8] sm:$0xff]
      %v233 = vld [vmem:[%s195 + $0xb0] sm:$0xff]
      %v234 = vld [vmem:[%s195 + $0xb8] sm:$0xff]
      %v235 = vld [vmem:[%s195 + $0xc0] sm:$0xff]
      %v236 = vld [vmem:[%s195 + $0xc8] sm:$0xff]
      %v237 = vld [vmem:[%s195 + $0xd0] sm:$0xff]
      %v238 = vld [vmem:[%s195 + $0xd8] sm:$0xff]
      %v239 = vld [vmem:[%s195 + $0xe0] sm:$0xff]
      %v240 = vld [vmem:[%s195 + $0xe8] sm:$0xff]
      %v241 = vld [vmem:[%s195 + $0xf0] sm:$0xff]
      %v242 = vld [vmem:[%s195 + $0xf8] sm:$0xff]
      %v243 = vld [vmem:[%s195 + $0x100] sm:$0xff]
      %v244 = vld [vmem:[%s195 + $0x108] sm:$0xff]
      %v245 = vld [vmem:[%s195 + $0x110] sm:$0xff]
      %v246 = vld [vmem:[%s195 + $0x118] sm:$0xff]
      %v247 = vld [vmem:[%s195 + $0x120] sm:$0xff]
      %v248 = vld [vmem:[%s195 + $0x128] sm:$0xff]
      %v249 = vld [vmem:[%s195 + $0x130] sm:$0xff]
      %v250 = vld [vmem:[%s195 + $0x138] sm:$0xff]
      %v251 = vld [vmem:[%s195 + $0x140] sm:$0xff]
      %v252 = vld [vmem:[%s195 + $0x148] sm:$0xff]
      %v253 = vld [vmem:[%s195 + $0x150] sm:$0xff]
      %v254 = vld [vmem:[%s195 + $0x158] sm:$0xff]
      %v255 = vld [vmem:[%s195 + $0x160] sm:$0xff]
      %v256 = vld [vmem:[%s195 + $0x168] sm:$0xff]
      %v257 = vld [vmem:[%s195 + $0x170] sm:$0xff]
      %v258 = vld [vmem:[%s195 + $0x178] sm:$0xff]
      %v259 = vld [vmem:[%s195 + $0x180] sm:$0xff]
      %v260 = vld [vmem:[%s195 + $0x188] sm:$0xff]
      %v261 = vld [vmem:[%s195 + $0x190] sm:$0xff]
      %v262 = vld [vmem:[%s195 + $0x198] sm:$0xff]
      %v263 = vld [vmem:[%s195 + $0x1a0] sm:$0xff]
      %v264 = vld [vmem:[%s195 + $0x1a8] sm:$0xff]
      %v265 = vld [vmem:[%s195 + $0x1b0] sm:$0xff]
      %v266 = vld [vmem:[%s195 + $0x1b8] sm:$0xff]
      %v267 = vld [vmem:[%s195 + $0x1c0] sm:$0xff]
      %v268 = vld [vmem:[%s195 + $0x1c8] sm:$0xff]
      %v269 = vld [vmem:[%s195 + $0x1d0] sm:$0xff]
      %v270 = vld [vmem:[%s195 + $0x1d8] sm:$0xff]
      %v271 = vld [vmem:[%s195 + $0x1e0] sm:$0xff]
      %v272 = vld [vmem:[%s195 + $0x1e8] sm:$0xff]
      %v273 = vld [vmem:[%s195 + $0x1f0] sm:$0xff]
      %v274 = vld [vmem:[%s195 + $0x1f8] sm:$0xff]
      %v275 = vld [vmem:[%s195 + $0x200] sm:$0xff]
      %v276 = vld [vmem:[%s195 + $0x208] sm:$0xff]
      %v277 = vld [vmem:[%s195 + $0x210] sm:$0xff]
      %v278 = vld [vmem:[%s195 + $0x218] sm:$0xff]
      %v279 = vld [vmem:[%s195 + $0x220] sm:$0xff]
      %v280 = vld [vmem:[%s195 + $0x228] sm:$0xff]
      %v281 = vld [vmem:[%s195 + $0x230] sm:$0xff]
      %v282 = vld [vmem:[%s195 + $0x238] sm:$0xff]
      %v283 = vld [vmem:[%s195 + $0x240] sm:$0xff]
      %v284 = vld [vmem:[%s195 + $0x248] sm:$0xff]
      %v285 = vld [vmem:[%s195 + $0x250] sm:$0xff]
      %v286 = vld [vmem:[%s195 + $0x258] sm:$0xff]
      %v287 = vld [vmem:[%s195 + $0x260] sm:$0xff]
      %v288 = vld [vmem:[%s195 + $0x268] sm:$0xff]
      %v289 = vld [vmem:[%s195 + $0x270] sm:$0xff]
      %v290 = vld [vmem:[%s195 + $0x278] sm:$0xff]
      %v291 = vld [vmem:[%s195 + $0x280] sm:$0xff]
      %v292 = vld [vmem:[%s195 + $0x288] sm:$0xff]
      %v293 = vld [vmem:[%s195 + $0x290] sm:$0xff]
      %v294 = vld [vmem:[%s195 + $0x298] sm:$0xff]
      %v295 = vld [vmem:[%s195 + $0x2a0] sm:$0xff]
      %v296 = vld [vmem:[%s195 + $0x2a8] sm:$0xff]
      %v297 = vld [vmem:[%s195 + $0x2b0] sm:$0xff]
      %v298 = vld [vmem:[%s195 + $0x2b8] sm:$0xff]
      %v299 = vld [vmem:[%s195 + $0x2c0] sm:$0xff]
      %v300 = vld [vmem:[%s195 + $0x2c8] sm:$0xff]
      %v301 = vld [vmem:[%s195 + $0x2d0] sm:$0xff]
      %v302 = vld [vmem:[%s195 + $0x2d8] sm:$0xff]
      %v303 = vld [vmem:[%s195 + $0x2e0] sm:$0xff]
      %v304 = vld [vmem:[%s195 + $0x2e8] sm:$0xff]
      %v305 = vld [vmem:[%s195 + $0x2f0] sm:$0xff]
      %v306 = vld [vmem:[%s195 + $0x2f8] sm:$0xff]
      %v307 = vld [vmem:[%s195 + $0x300] sm:$0xff]
      %v308 = vld [vmem:[%s195 + $0x308] sm:$0xff]
      %v309 = vld [vmem:[%s195 + $0x310] sm:$0xff]
      %v310 = vld [vmem:[%s195 + $0x318] sm:$0xff]
      %v311 = vld [vmem:[%s195 + $0x320] sm:$0xff]
      %v312 = vld [vmem:[%s195 + $0x328] sm:$0xff]
      %v313 = vld [vmem:[%s195 + $0x330] sm:$0xff]
      %v314 = vld [vmem:[%s195 + $0x338] sm:$0xff]
      %v315 = vld [vmem:[%s195 + $0x340] sm:$0xff]
      %v316 = vld [vmem:[%s195 + $0x348] sm:$0xff]
      %v317 = vld [vmem:[%s195 + $0x350] sm:$0xff]
      %v318 = vld [vmem:[%s195 + $0x358] sm:$0xff]
      %v319 = vld [vmem:[%s195 + $0x360] sm:$0xff]
      %v320 = vld [vmem:[%s195 + $0x368] sm:$0xff]
      %v321 = vld [vmem:[%s195 + $0x370] sm:$0xff]
      %v322 = vld [vmem:[%s195 + $0x378] sm:$0xff]
      %v323 = vld [vmem:[%s195 + $0x380] sm:$0xff]
      %v324 = vld [vmem:[%s195 + $0x388] sm:$0xff]
      %v325 = vld [vmem:[%s195 + $0x390] sm:$0xff]
      %v326 = vld [vmem:[%s195 + $0x398] sm:$0xff]
      %v327 = vld [vmem:[%s195 + $0x3a0] sm:$0xff]
      %v328 = vld [vmem:[%s195 + $0x3a8] sm:$0xff]
      %v329 = vld [vmem:[%s195 + $0x3b0] sm:$0xff]
      %v330 = vld [vmem:[%s195 + $0x3b8] sm:$0xff]
      %v331 = vld [vmem:[%s195 + $0x3c0] sm:$0xff]
      %v332 = vld [vmem:[%s195 + $0x3c8] sm:$0xff]
      %v333 = vld [vmem:[%s195 + $0x3d0] sm:$0xff]
      %v334 = vld [vmem:[%s195 + $0x3d8] sm:$0xff]
      %v335 = vld [vmem:[%s195 + $0x3e0] sm:$0xff]
      %v336 = vld [vmem:[%s195 + $0x3e8] sm:$0xff]
      %v337 = vld [vmem:[%s195 + $0x3f0] sm:$0xff]
      %v338 = vld [vmem:[%s195 + $0x3f8] sm:$0xff]
      %v339 = vld [vmem:[%s198] sm:$0x1]
      %v341 = vlaneseq
      %v342 = vshrl.u32 %v341, 7
      %v343 = vsub.s32 0, %v342
      %v344 = vrot.slane %v339, %v343
      %346 = vmatprep.subr.mxu0 0.0
      %347 = vmatpush1.msra.mxu0 %v226
      %348 = vmatprep.subr.mxu0 0.0
      %349 = vmatpush1.msra.mxu0 %v225
      %350 = vmatprep.subr.mxu0 0.0
      %351 = vmatpush1.msra.mxu0 %v224
      %352 = vmatprep.subr.mxu0 0.0
      %353 = vmatpush1.msra.mxu0 %v223
      %354 = vmatprep.subr.mxu0 0.0
      %355 = vmatpush1.msra.mxu0 %v222
      %356 = vmatprep.subr.mxu0 0.0
      %357 = vmatpush1.msra.mxu0 %v221
      %358 = vmatprep.subr.mxu0 0.0
      %359 = vmatpush1.msra.mxu0 %v220
      %360 = vmatprep.subr.mxu0 0.0
      %361 = vmatpush1.msra.mxu0 %v219
      %362 = vmatprep.subr.mxu0 0.0
      %363 = vmatpush1.msra.mxu0 %v218
      %364 = vmatprep.subr.mxu0 0.0
      %365 = vmatpush1.msra.mxu0 %v217
      %366 = vmatprep.subr.mxu0 0.0
      %367 = vmatpush1.msra.mxu0 %v216
      %368 = vmatprep.subr.mxu0 0.0
      %369 = vmatpush1.msra.mxu0 %v215
      %370 = vmatprep.subr.mxu0 0.0
      %371 = vmatpush1.msra.mxu0 %v214
      %372 = vmatprep.subr.mxu0 0.0
      %373 = vmatpush1.msra.mxu0 %v213
      %374 = vmatprep.subr.mxu0 0.0
      %375 = vmatpush1.msra.mxu0 %v212
      %376 = vmatprep.subr.mxu0 0.0
      %377 = vmatpush1.msra.mxu0 %v211
      %378 = vmatprep.subr.mxu0 0.0
      %379 = vmatpush2.msra.mxu0 %v242
      %380 = vmatprep.subr.mxu0 0.0
      %381 = vmatpush2.msra.mxu0 %v241
      %382 = vmatprep.subr.mxu0 0.0
      %383 = vmatpush2.msra.mxu0 %v240
      %384 = vmatprep.subr.mxu0 0.0
      %385 = vmatpush2.msra.mxu0 %v239
      %386 = vmatprep.subr.mxu0 0.0
      %387 = vmatpush2.msra.mxu0 %v238
      %388 = vmatprep.subr.mxu0 0.0
      %389 = vmatpush2.msra.mxu0 %v237
      %390 = vmatprep.subr.mxu0 0.0
      %391 = vmatpush2.msra.mxu0 %v236
      %392 = vmatprep.subr.mxu0 0.0
      %393 = vmatpush2.msra.mxu0 %v235
      %394 = vmatprep.subr.mxu0 0.0
      %395 = vmatpush2.msra.mxu0 %v234
      %396 = vmatprep.subr.mxu0 0.0
      %397 = vmatpush2.msra.mxu0 %v233
      %398 = vmatprep.subr.mxu0 0.0
      %399 = vmatpush2.msra.mxu0 %v232
      %400 = vmatprep.subr.mxu0 0.0
      %401 = vmatpush2.msra.mxu0 %v231
      %402 = vmatprep.subr.mxu0 0.0
      %403 = vmatpush2.msra.mxu0 %v230
      %404 = vmatprep.subr.mxu0 0.0
      %405 = vmatpush2.msra.mxu0 %v229
      %406 = vmatprep.subr.mxu0 0.0
      %407 = vmatpush2.msra.mxu0 %v228
      %408 = vmatprep.subr.mxu0 0.0
      %409 = vmatpush2.msra.mxu0 %v227
      %410 = vmatprep.mubr.f32.mxu0 %v204
      %411 = vmatmul.mubr.f32.gmra.mxu0 %v203
      %v412 = vpop.f32.mrf.mxu0
      %v413 = vadd.f32 %v344, %v412
      %v414 = vpop.f32.mrf.mxu0
      %415 = vdwg.mxu0
      %416 = vmatprep.subr.mxu0 0.0
      %417 = vmatpush1.msra.mxu0 %v258
      %418 = vmatprep.subr.mxu0 0.0
      %419 = vmatpush1.msra.mxu0 %v257
      %420 = vmatprep.subr.mxu0 0.0
      %421 = vmatpush1.msra.mxu0 %v256
      %422 = vmatprep.subr.mxu0 0.0
      %423 = vmatpush1.msra.mxu0 %v255
      %424 = vmatprep.subr.mxu0 0.0
      %425 = vmatpush1.msra.mxu0 %v254
      %426 = vmatprep.subr.mxu0 0.0
      %427 = vmatpush1.msra.mxu0 %v253
      %428 = vmatprep.subr.mxu0 0.0
      %429 = vmatpush1.msra.mxu0 %v252
      %430 = vmatprep.subr.mxu0 0.0
      %431 = vmatpush1.msra.mxu0 %v251
      %432 = vmatprep.subr.mxu0 0.0
      %433 = vmatpush1.msra.mxu0 %v250
      %434 = vmatprep.subr.mxu0 0.0
      %435 = vmatpush1.msra.mxu0 %v249
      %436 = vmatprep.subr.mxu0 0.0
      %437 = vmatpush1.msra.mxu0 %v248
      %438 = vmatprep.subr.mxu0 0.0
      %439 = vmatpush1.msra.mxu0 %v247
      %440 = vmatprep.subr.mxu0 0.0
      %441 = vmatpush1.msra.mxu0 %v246
      %442 = vmatprep.subr.mxu0 0.0
      %443 = vmatpush1.msra.mxu0 %v245
      %444 = vmatprep.subr.mxu0 0.0
      %445 = vmatpush1.msra.mxu0 %v244
      %446 = vmatprep.subr.mxu0 0.0
      %447 = vmatpush1.msra.mxu0 %v243
      %448 = vmatprep.subr.mxu0 0.0
      %449 = vmatpush2.msra.mxu0 %v274
      %450 = vmatprep.subr.mxu0 0.0
      %451 = vmatpush2.msra.mxu0 %v273
      %452 = vmatprep.subr.mxu0 0.0
      %453 = vmatpush2.msra.mxu0 %v272
      %454 = vmatprep.subr.mxu0 0.0
      %455 = vmatpush2.msra.mxu0 %v271
      %456 = vmatprep.subr.mxu0 0.0
      %457 = vmatpush2.msra.mxu0 %v270
      %458 = vmatprep.subr.mxu0 0.0
      %459 = vmatpush2.msra.mxu0 %v269
      %460 = vmatprep.subr.mxu0 0.0
      %461 = vmatpush2.msra.mxu0 %v268
      %462 = vmatprep.subr.mxu0 0.0
      %463 = vmatpush2.msra.mxu0 %v267
      %464 = vmatprep.subr.mxu0 0.0
      %465 = vmatpush2.msra.mxu0 %v266
      %466 = vmatprep.subr.mxu0 0.0
      %467 = vmatpush2.msra.mxu0 %v265
      %468 = vmatprep.subr.mxu0 0.0
      %469 = vmatpush2.msra.mxu0 %v264
      %470 = vmatprep.subr.mxu0 0.0
      %471 = vmatpush2.msra.mxu0 %v263
      %472 = vmatprep.subr.mxu0 0.0
      %473 = vmatpush2.msra.mxu0 %v262
      %474 = vmatprep.subr.mxu0 0.0
      %475 = vmatpush2.msra.mxu0 %v261
      %476 = vmatprep.subr.mxu0 0.0
      %477 = vmatpush2.msra.mxu0 %v260
      %478 = vmatprep.subr.mxu0 0.0
      %479 = vmatpush2.msra.mxu0 %v259
      %480 = vmatprep.mubr.f32.mxu0 %v206
      %481 = vmatmul.mubr.f32.gmra.mxu0 %v205
      %v482 = vpop.f32.mrf.mxu0
      %v483 = vadd.f32 %v413, %v482
      %v484 = vpop.f32.mrf.mxu0
      %485 = vdwg.mxu0
      %486 = vmatprep.subr.mxu0 0.0
      %487 = vmatpush1.msra.mxu0 %v290
      %488 = vmatprep.subr.mxu0 0.0
      %489 = vmatpush1.msra.mxu0 %v289
      %490 = vmatprep.subr.mxu0 0.0
      %491 = vmatpush1.msra.mxu0 %v288
      %492 = vmatprep.subr.mxu0 0.0
      %493 = vmatpush1.msra.mxu0 %v287
      %494 = vmatprep.subr.mxu0 0.0
      %495 = vmatpush1.msra.mxu0 %v286
      %496 = vmatprep.subr.mxu0 0.0
      %497 = vmatpush1.msra.mxu0 %v285
      %498 = vmatprep.subr.mxu0 0.0
      %499 = vmatpush1.msra.mxu0 %v284
      %500 = vmatprep.subr.mxu0 0.0
      %501 = vmatpush1.msra.mxu0 %v283
      %502 = vmatprep.subr.mxu0 0.0
      %503 = vmatpush1.msra.mxu0 %v282
      %504 = vmatprep.subr.mxu0 0.0
      %505 = vmatpush1.msra.mxu0 %v281
      %506 = vmatprep.subr.mxu0 0.0
      %507 = vmatpush1.msra.mxu0 %v280
      %508 = vmatprep.subr.mxu0 0.0
      %509 = vmatpush1.msra.mxu0 %v279
      %510 = vmatprep.subr.mxu0 0.0
      %511 = vmatpush1.msra.mxu0 %v278
      %512 = vmatprep.subr.mxu0 0.0
      %513 = vmatpush1.msra.mxu0 %v277
      %514 = vmatprep.subr.mxu0 0.0
      %515 = vmatpush1.msra.mxu0 %v276
      %516 = vmatprep.subr.mxu0 0.0
      %517 = vmatpush1.msra.mxu0 %v275
      %518 = vmatprep.subr.mxu0 0.0
      %519 = vmatpush2.msra.mxu0 %v306
      %520 = vmatprep.subr.mxu0 0.0
      %521 = vmatpush2.msra.mxu0 %v305
      %522 = vmatprep.subr.mxu0 0.0
      %523 = vmatpush2.msra.mxu0 %v304
      %524 = vmatprep.subr.mxu0 0.0
      %525 = vmatpush2.msra.mxu0 %v303
      %526 = vmatprep.subr.mxu0 0.0
      %527 = vmatpush2.msra.mxu0 %v302
      %528 = vmatprep.subr.mxu0 0.0
      %529 = vmatpush2.msra.mxu0 %v301
      %530 = vmatprep.subr.mxu0 0.0
      %531 = vmatpush2.msra.mxu0 %v300
      %532 = vmatprep.subr.mxu0 0.0
      %533 = vmatpush2.msra.mxu0 %v299
      %534 = vmatprep.subr.mxu0 0.0
      %535 = vmatpush2.msra.mxu0 %v298
      %536 = vmatprep.subr.mxu0 0.0
      %537 = vmatpush2.msra.mxu0 %v297
      %538 = vmatprep.subr.mxu0 0.0
      %539 = vmatpush2.msra.mxu0 %v296
      %540 = vmatprep.subr.mxu0 0.0
      %541 = vmatpush2.msra.mxu0 %v295
      %542 = vmatprep.subr.mxu0 0.0
      %543 = vmatpush2.msra.mxu0 %v294
      %544 = vmatprep.subr.mxu0 0.0
      %545 = vmatpush2.msra.mxu0 %v293
      %546 = vmatprep.subr.mxu0 0.0
      %547 = vmatpush2.msra.mxu0 %v292
      %548 = vmatprep.subr.mxu0 0.0
      %549 = vmatpush2.msra.mxu0 %v291
      %550 = vmatprep.mubr.f32.mxu0 %v208
      %551 = vmatmul.mubr.f32.gmra.mxu0 %v207
      %v552 = vpop.f32.mrf.mxu0
      %v553 = vadd.f32 %v483, %v552
      %v554 = vpop.f32.mrf.mxu0
      %555 = vdwg.mxu0
      %556 = vmatprep.subr.mxu0 0.0
      %557 = vmatpush1.msra.mxu0 %v322
      %558 = vmatprep.subr.mxu0 0.0
      %559 = vmatpush1.msra.mxu0 %v321
      %560 = vmatprep.subr.mxu0 0.0
      %561 = vmatpush1.msra.mxu0 %v320
      %562 = vmatprep.subr.mxu0 0.0
      %563 = vmatpush1.msra.mxu0 %v319
      %564 = vmatprep.subr.mxu0 0.0
      %565 = vmatpush1.msra.mxu0 %v318
      %566 = vmatprep.subr.mxu0 0.0
      %567 = vmatpush1.msra.mxu0 %v317
      %568 = vmatprep.subr.mxu0 0.0
      %569 = vmatpush1.msra.mxu0 %v316
      %570 = vmatprep.subr.mxu0 0.0
      %571 = vmatpush1.msra.mxu0 %v315
      %572 = vmatprep.subr.mxu0 0.0
      %573 = vmatpush1.msra.mxu0 %v314
      %574 = vmatprep.subr.mxu0 0.0
      %575 = vmatpush1.msra.mxu0 %v313
      %576 = vmatprep.subr.mxu0 0.0
      %577 = vmatpush1.msra.mxu0 %v312
      %578 = vmatprep.subr.mxu0 0.0
      %579 = vmatpush1.msra.mxu0 %v311
      %580 = vmatprep.subr.mxu0 0.0
      %581 = vmatpush1.msra.mxu0 %v310
      %582 = vmatprep.subr.mxu0 0.0
      %583 = vmatpush1.msra.mxu0 %v309
      %584 = vmatprep.subr.mxu0 0.0
      %585 = vmatpush1.msra.mxu0 %v308
      %586 = vmatprep.subr.mxu0 0.0
      %587 = vmatpush1.msra.mxu0 %v307
      %588 = vmatprep.subr.mxu0 0.0
      %589 = vmatpush2.msra.mxu0 %v338
      %590 = vmatprep.subr.mxu0 0.0
      %591 = vmatpush2.msra.mxu0 %v337
      %592 = vmatprep.subr.mxu0 0.0
      %593 = vmatpush2.msra.mxu0 %v336
      %594 = vmatprep.subr.mxu0 0.0
      %595 = vmatpush2.msra.mxu0 %v335
      %596 = vmatprep.subr.mxu0 0.0
      %597 = vmatpush2.msra.mxu0 %v334
      %598 = vmatprep.subr.mxu0 0.0
      %599 = vmatpush2.msra.mxu0 %v333
      %600 = vmatprep.subr.mxu0 0.0
      %601 = vmatpush2.msra.mxu0 %v332
      %602 = vmatprep.subr.mxu0 0.0
      %603 = vmatpush2.msra.mxu0 %v331
      %604 = vmatprep.subr.mxu0 0.0
      %605 = vmatpush2.msra.mxu0 %v330
      %606 = vmatprep.subr.mxu0 0.0
      %607 = vmatpush2.msra.mxu0 %v329
      %608 = vmatprep.subr.mxu0 0.0
      %609 = vmatpush2.msra.mxu0 %v328
      %610 = vmatprep.subr.mxu0 0.0
      %611 = vmatpush2.msra.mxu0 %v327
      %612 = vmatprep.subr.mxu0 0.0
      %613 = vmatpush2.msra.mxu0 %v326
      %614 = vmatprep.subr.mxu0 0.0
      %615 = vmatpush2.msra.mxu0 %v325
      %616 = vmatprep.subr.mxu0 0.0
      %617 = vmatpush2.msra.mxu0 %v324
      %618 = vmatprep.subr.mxu0 0.0
      %619 = vmatpush2.msra.mxu0 %v323
      %620 = vmatprep.mubr.f32.mxu0 %v210
      %621 = vmatmul.mubr.f32.gmra.mxu0 %v209
      %v622 = vpop.f32.mrf.mxu0
      %v623 = vadd.f32 %v553, %v622
      %v624 = vpop.f32.mrf.mxu0
      %625 = vdwg.mxu0
      %v626 = vmul.f32 %v623, %v623
      %627 = vadd.xlane.f32.xlu0 %v626
      %v628 = vpop.xlane.xlu0 %627
      %v629 = vmax.f32 %v628, 1e-24
      %v630 = vrsqrt.pop %v629
      %v631 = vmul.f32 %v623, %v630
      %632 = vst [vmem:[%s202] sm:$0xff] %v631
      %p633 = scmp.lt.s32.totalorder %s14, 1
      %s634 = scalar_select %p633, %s14, 1
      %s635 = smul.addr %s634, 8
      %s636 = scalar_lea.vmem %s3, %s635
      // Predicated region
      $region33: #{moco_forward.4} parent=31 // pred_check
        %p637 = pneg %p110
      $region34: #{moco_forward.4} parent=31 // pred_check_branch
        %639 = sbr.rel (%p637) target = $region36
      $region35: #{moco_forward.4} parent=31 // pred_region
        _
      $region36: #{moco_forward.4} parent=31 // pred_fallthru
        _
    $region32: #{moco_forward.4} parent=5 // pred_fallthru
      _
    %p640 = scmp.le.s32.totalorder 2, %s9
    // Predicated region
    $region37: #{moco_forward.4} parent=5 // pred_check
      %p641 = pneg %p640
    $region38: #{moco_forward.4} parent=5 // pred_check_branch
      %643 = sbr.rel (%p641) target = $region40
    $region39: #{moco_forward.4} parent=5 // pred_region
      %s644 = ssub.s32 %s9, 2
      // Predicated region
      $region41: #{moco_forward.4} parent=39 // pred_check
        %p645 = pneg %p116
      $region42: #{moco_forward.4} parent=39 // pred_check_branch
        %647 = sbr.rel (%p645) target = $region44
      $region43: #{moco_forward.4} parent=39 // pred_region
        %p648 = scmp.lt.s32.totalorder %s15, 1
        %s649 = scalar_select %p648, %s15, 1
        %s650 = smul.addr %s649, 8
        %s651 = scalar_lea.vmem %s3, %s650
      $region44: #{moco_forward.4} parent=39 // pred_fallthru
        _
    $region40: #{moco_forward.4} parent=5 // pred_fallthru
      _
  $region6: #{moco_forward.4} parent=0 // loop_footer
    %s13 = sadd.s32 1, %s9
  $region7: #{moco_forward.4} parent=0 // loop_footer_branch
    %8 = sbr.rel target = $region3
  $region8: #{moco_forward.4} parent=0 // loop_exit
    _

</llo_original>
